<compile_context>
chip_gen: v7x
topology: tpu7x:2x2x1
jax: 0.10.0
libtpu: 0.0.40
codegen_flags: <defaults>
</compile_context>

<pallas_src>
import functools

import jax
import jax.numpy as jnp
from jax.experimental import pallas as pl
from jax.experimental.pallas import tpu as pltpu


def _round_up(n, m):
    return ((n + m - 1) // m) * m


# ---------------------------------------------------------------------------
# Kernel 1: reparameterized weight sampling, runs ONCE per forward pass.
# Each input ref is a stacked (3, ...) tensor: [mu, rho, eps].
#   sampled = mu + log(1 + exp(rho)) * eps
# Weight outputs are written in the MXU operand dtype; biases stay f32.
# ---------------------------------------------------------------------------
def _sample_params_kernel(w1_ref, b1_ref, w2_ref, b2_ref,
                          sw1_ref, sb1_ref, sw2_ref, sb2_ref):
    def sample(ref, out_ref):
        out_ref[...] = (ref[0] + jnp.log1p(jnp.exp(ref[1])) * ref[2]
                        ).astype(out_ref.dtype)

    sample(w1_ref, sw1_ref)
    sample(b1_ref, sb1_ref)
    sample(w2_ref, sw2_ref)
    sample(b2_ref, sb2_ref)


# ---------------------------------------------------------------------------
# Kernel 2: fused MLP forward on one batch tile.
#   x: (TB, Fp)   w1: (Fp, Hp)  b1: (1, Hp)   w2: (Hp, Cp)  b2: (1, Cp)
# Weights arrive already sampled, transposed to (in, out), zero-padded and in
# mxu_dtype, so the MXU contracts directly and all stores are lane-dense.
# ---------------------------------------------------------------------------
def _mlp_tile_kernel(x_ref, w1_ref, b1_ref, w2_ref, b2_ref, out_ref, *,
                     mxu_dtype):
    x = x_ref[...].astype(mxu_dtype)
    h_pre = jnp.dot(x, w1_ref[...],
                    preferred_element_type=jnp.float32) + b1_ref[...]
    h = jax.nn.sigmoid(h_pre)                      # f32 elementwise (v5e-safe)
    y = jnp.dot(h.astype(mxu_dtype), w2_ref[...],
                preferred_element_type=jnp.float32) + b2_ref[...]
    out_ref[...] = y.astype(out_ref.dtype)


@functools.partial(jax.jit, static_argnames=("mxu_dtype", "tile_b"))
def mlp_bbb_forward(x, params, eps, *, mxu_dtype=jnp.bfloat16, tile_b=512):
    """x: (B, in_features) f32. params / eps: dicts of f32 arrays, torch layout."""
    B, F = x.shape
    H = params["w_mu1"].shape[0]            # hidden width (64)
    C = params["w_mu2"].shape[0]            # class_num

    Fp = _round_up(F, 128)                  # lane-dense padded dims
    Hp = _round_up(H, 128)
    Cp = _round_up(C, 128)
    TB = min(tile_b, _round_up(B, 8))       # batch tile (sublane multiple)
    Bp = _round_up(B, TB)

    f32 = jnp.float32

    # ---- pack (mu, rho, eps): transpose weights (out,in)->(in,out) in XLA
    #      (one-time, fused under jit) and zero-pad to lane-dense shapes.
    def pack_w(mu, rho, ep, rows, cols):
        def prep(a):
            a = a.T.astype(f32)
            return jnp.pad(a, ((0, rows - a.shape[0]), (0, cols - a.shape[1])))
        return jnp.stack([prep(mu), prep(rho), prep(ep)])

    def pack_b(mu, rho, ep, cols):
        def prep(a):
            a = a.reshape(1, -1).astype(f32)
            return jnp.pad(a, ((0, 0), (0, cols - a.shape[1])))
        return jnp.stack([prep(mu), prep(rho), prep(ep)])

    w1p = pack_w(params["w_mu1"], params["w_rho1"], eps["w1"], Fp, Hp)
    b1p = pack_b(params["b_mu1"], params["b_rho1"], eps["b1"], Hp)
    w2p = pack_w(params["w_mu2"], params["w_rho2"], eps["w2"], Hp, Cp)
    b2p = pack_b(params["b_mu2"], params["b_rho2"], eps["b2"], Cp)

    vmem = pl.BlockSpec(memory_space=pltpu.MemorySpace.VMEM)
    n_param = Fp * Hp + Hp + Hp * Cp + Cp
    sw1, sb1, sw2, sb2 = pl.pallas_call(
        _sample_params_kernel,
        out_shape=(jax.ShapeDtypeStruct((Fp, Hp), mxu_dtype),
                   jax.ShapeDtypeStruct((1, Hp), f32),
                   jax.ShapeDtypeStruct((Hp, Cp), mxu_dtype),
                   jax.ShapeDtypeStruct((1, Cp), f32)),
        in_specs=[vmem, vmem, vmem, vmem],
        out_specs=(vmem, vmem, vmem, vmem),
        cost_estimate=pl.CostEstimate(
            flops=3 * n_param,
            transcendentals=2 * n_param,
            bytes_accessed=4 * 4 * n_param),
    )(w1p, b1p, w2p, b2p)

    # ---- tiled, batch-parallel fused MLP
    xp = jnp.pad(x.astype(f32), ((0, Bp - B), (0, Fp - F)))

    out_padded = pl.pallas_call(
        functools.partial(_mlp_tile_kernel, mxu_dtype=mxu_dtype),
        out_shape=jax.ShapeDtypeStruct((Bp, Cp), f32),
        grid_spec=pltpu.PrefetchScalarGridSpec(
            num_scalar_prefetch=0,
            grid=(Bp // TB,),
            in_specs=[
                pl.BlockSpec((TB, Fp), lambda i: (i, 0)),   # x tile (pipelined)
                pl.BlockSpec((Fp, Hp), lambda i: (0, 0)),   # W1 (resident)
                pl.BlockSpec((1, Hp), lambda i: (0, 0)),    # b1
                pl.BlockSpec((Hp, Cp), lambda i: (0, 0)),   # W2
                pl.BlockSpec((1, Cp), lambda i: (0, 0)),    # b2
            ],
            out_specs=pl.BlockSpec((TB, Cp), lambda i: (i, 0)),
        ),
        compiler_params=pltpu.CompilerParams(
            dimension_semantics=("parallel",),              # megacore on v7x
            vmem_limit_bytes=32 * 1024 * 1024),
        cost_estimate=pl.CostEstimate(
            flops=2 * Bp * (Fp * Hp + Hp * Cp) + Bp * (Hp + Cp),
            transcendentals=Bp * Hp,                        # sigmoid
            bytes_accessed=4 * (Bp * Fp + Hp + Cp + Bp * Cp)
                           + 2 * (Fp * Hp + Hp * Cp)),
    )(xp, sw1, sb1, sw2, sb2)

    return out_padded[:B, :C]


def _reference(x, params, eps, mxu_dtype=jnp.float32):
    """Pure-JAX reference of the PyTorch forward (optionally bf16 MXU operands)."""
    sp = lambda r: jnp.log1p(jnp.exp(r))
    w1 = params["w_mu1"] + sp(params["w_rho1"]) * eps["w1"]
    b1 = params["b_mu1"] + sp(params["b_rho1"]) * eps["b1"]
    w2 = params["w_mu2"] + sp(params["w_rho2"]) * eps["w2"]
    b2 = params["b_mu2"] + sp(params["b_rho2"]) * eps["b2"]
    dot = lambda a, b: jnp.dot(a.astype(mxu_dtype), b.astype(mxu_dtype),
                               preferred_element_type=jnp.float32)
    h = jax.nn.sigmoid(dot(x, w1.T) + b1)
    return dot(h, w2.T) + b2


if __name__ == "__main__":
    # Shapes consistent with MLP_BBB(hidden_units, class_num=5):
    #   input features = 32, hidden layer = 64, class_num = 5
    batch, in_features, hidden_dim, class_num = 8, 32, 64, 5

    key = jax.random.PRNGKey(0)
    kx, kw1, kb1, kw2, kb2, kx2 = jax.random.split(key, 6)

    x = jax.random.normal(kx, (batch, in_features), dtype=jnp.float32)

    # Parameters initialized to zeros, exactly like the PyTorch __init__.
    params = {
        "w_mu1":  jnp.zeros((hidden_dim, in_features), jnp.float32),
        "w_rho1": jnp.zeros((hidden_dim, in_features), jnp.float32),
        "b_mu1":  jnp.zeros((hidden_dim,), jnp.float32),
        "b_rho1": jnp.zeros((hidden_dim,), jnp.float32),
        "w_mu2":  jnp.zeros((class_num, hidden_dim), jnp.float32),
        "w_rho2": jnp.zeros((class_num, hidden_dim), jnp.float32),
        "b_mu2":  jnp.zeros((class_num,), jnp.float32),
        "b_rho2": jnp.zeros((class_num,), jnp.float32),
    }
    # Deterministic N(0,1) noise standing in for Normal(0,1).sample(...)
    eps = {
        "w1": jax.random.normal(kw1, (hidden_dim, in_features), dtype=jnp.float32),
        "b1": jax.random.normal(kb1, (hidden_dim,), dtype=jnp.float32),
        "w2": jax.random.normal(kw2, (class_num, hidden_dim), dtype=jnp.float32),
        "b2": jax.random.normal(kb2, (class_num,), dtype=jnp.float32),
    }

    # Exact f32 MXU path vs pure-JAX reference (tight tolerance).
    out_f32 = jax.block_until_ready(
        mlp_bbb_forward(x, params, eps, mxu_dtype=jnp.float32))
    ref_f32 = _reference(x, params, eps, mxu_dtype=jnp.float32)
    assert out_f32.shape == (batch, class_num)
    assert jnp.allclose(out_f32, ref_f32, atol=1e-4, rtol=1e-4), "f32 mismatch"

    # Default bf16-operand MXU path vs a bf16-operand reference.
    out_bf16 = jax.block_until_ready(mlp_bbb_forward(x, params, eps))
    ref_bf16 = _reference(x, params, eps, mxu_dtype=jnp.bfloat16)
    assert jnp.allclose(out_bf16, ref_bf16, atol=1e-2, rtol=1e-2), "bf16 mismatch"

    # Larger batch exercising the parallel batch grid (>1 tile) + batch padding.
    big_b = 1050
    xb = jax.random.normal(kx2, (big_b, in_features), dtype=jnp.float32)
    out_big = jax.block_until_ready(mlp_bbb_forward(xb, params, eps))
    ref_big = _reference(xb, params, eps, mxu_dtype=jnp.bfloat16)
    assert out_big.shape == (big_b, class_num)
    assert jnp.allclose(out_big, ref_big, atol=1e-2, rtol=1e-2), "tiled mismatch"

    print("KERNEL_OK")
</pallas_src>

<mosaic_0001>
module attributes {stable_mosaic.version = 11 : i64} {
  func.func @_sample_params_kernel(%arg0: memref<3x128x128xf32, #tpu.memory_space<vmem>>, %arg1: memref<3x1x128xf32, #tpu.memory_space<vmem>>, %arg2: memref<3x128x128xf32, #tpu.memory_space<vmem>>, %arg3: memref<3x1x128xf32, #tpu.memory_space<vmem>>, %arg4: memref<128x128xf32, #tpu.memory_space<vmem>>, %arg5: memref<1x128xf32, #tpu.memory_space<vmem>>, %arg6: memref<128x128xf32, #tpu.memory_space<vmem>>, %arg7: memref<1x128xf32, #tpu.memory_space<vmem>>) attributes {dimension_semantics = [], scalar_prefetch = 0 : i64, scratch_operands = 0 : i64, tpu.core_type = #tpu.core_type<tc>} {
    %c0 = arith.constant 0 : index
    %c0_0 = arith.constant 0 : index
    %c0_1 = arith.constant 0 : index
    %0 = vector.load %arg0[%c0, %c0_0, %c0_1] : memref<3x128x128xf32, #tpu.memory_space<vmem>>, vector<1x128x128xf32>
    %1 = vector.shape_cast %0 : vector<1x128x128xf32> to vector<128x128xf32>
    %c1 = arith.constant 1 : index
    %c0_2 = arith.constant 0 : index
    %c0_3 = arith.constant 0 : index
    %2 = vector.load %arg0[%c1, %c0_2, %c0_3] : memref<3x128x128xf32, #tpu.memory_space<vmem>>, vector<1x128x128xf32>
    %3 = vector.shape_cast %2 : vector<1x128x128xf32> to vector<128x128xf32>
    %4 = math.exp %3 : vector<128x128xf32>
    %5 = math.log1p %4 : vector<128x128xf32>
    %c2 = arith.constant 2 : index
    %c0_4 = arith.constant 0 : index
    %c0_5 = arith.constant 0 : index
    %6 = vector.load %arg0[%c2, %c0_4, %c0_5] : memref<3x128x128xf32, #tpu.memory_space<vmem>>, vector<1x128x128xf32>
    %7 = vector.shape_cast %6 : vector<1x128x128xf32> to vector<128x128xf32>
    %8 = arith.mulf %5, %7 : vector<128x128xf32>
    %9 = arith.addf %1, %8 : vector<128x128xf32>
    %c0_6 = arith.constant 0 : index
    %c0_7 = arith.constant 0 : index
    %10 = vector.load %arg4[%c0_6, %c0_7] : memref<128x128xf32, #tpu.memory_space<vmem>>, vector<128x128xf32>
    tpu.vector_store %arg4[%c0_6, %c0_7], %9 {strides = array<i32>} : memref<128x128xf32, #tpu.memory_space<vmem>>, vector<128x128xf32>,
    %c0_8 = arith.constant 0 : index
    %c0_9 = arith.constant 0 : index
    %c0_10 = arith.constant 0 : index
    %11 = vector.load %arg1[%c0_8, %c0_9, %c0_10] : memref<3x1x128xf32, #tpu.memory_space<vmem>>, vector<1x1x128xf32>
    %12 = vector.shape_cast %11 : vector<1x1x128xf32> to vector<1x128xf32>
    %c1_11 = arith.constant 1 : index
    %c0_12 = arith.constant 0 : index
    %c0_13 = arith.constant 0 : index
    %13 = vector.load %arg1[%c1_11, %c0_12, %c0_13] : memref<3x1x128xf32, #tpu.memory_space<vmem>>, vector<1x1x128xf32>
    %14 = vector.shape_cast %13 : vector<1x1x128xf32> to vector<1x128xf32>
    %15 = math.exp %14 : vector<1x128xf32>
    %16 = math.log1p %15 : vector<1x128xf32>
    %c2_14 = arith.constant 2 : index
    %c0_15 = arith.constant 0 : index
    %c0_16 = arith.constant 0 : index
    %17 = vector.load %arg1[%c2_14, %c0_15, %c0_16] : memref<3x1x128xf32, #tpu.memory_space<vmem>>, vector<1x1x128xf32>
    %18 = vector.shape_cast %17 : vector<1x1x128xf32> to vector<1x128xf32>
    %19 = arith.mulf %16, %18 : vector<1x128xf32>
    %20 = arith.addf %12, %19 : vector<1x128xf32>
    %c0_17 = arith.constant 0 : index
    %c0_18 = arith.constant 0 : index
    %21 = vector.load %arg5[%c0_17, %c0_18] : memref<1x128xf32, #tpu.memory_space<vmem>>, vector<1x128xf32>
    tpu.vector_store %arg5[%c0_17, %c0_18], %20 {strides = array<i32>} : memref<1x128xf32, #tpu.memory_space<vmem>>, vector<1x128xf32>,
    %c0_19 = arith.constant 0 : index
    %c0_20 = arith.constant 0 : index
    %c0_21 = arith.constant 0 : index
    %22 = vector.load %arg2[%c0_19, %c0_20, %c0_21] : memref<3x128x128xf32, #tpu.memory_space<vmem>>, vector<1x128x128xf32>
    %23 = vector.shape_cast %22 : vector<1x128x128xf32> to vector<128x128xf32>
    %c1_22 = arith.constant 1 : index
    %c0_23 = arith.constant 0 : index
    %c0_24 = arith.constant 0 : index
    %24 = vector.load %arg2[%c1_22, %c0_23, %c0_24] : memref<3x128x128xf32, #tpu.memory_space<vmem>>, vector<1x128x128xf32>
    %25 = vector.shape_cast %24 : vector<1x128x128xf32> to vector<128x128xf32>
    %26 = math.exp %25 : vector<128x128xf32>
    %27 = math.log1p %26 : vector<128x128xf32>
    %c2_25 = arith.constant 2 : index
    %c0_26 = arith.constant 0 : index
    %c0_27 = arith.constant 0 : index
    %28 = vector.load %arg2[%c2_25, %c0_26, %c0_27] : memref<3x128x128xf32, #tpu.memory_space<vmem>>, vector<1x128x128xf32>
    %29 = vector.shape_cast %28 : vector<1x128x128xf32> to vector<128x128xf32>
    %30 = arith.mulf %27, %29 : vector<128x128xf32>
    %31 = arith.addf %23, %30 : vector<128x128xf32>
    %c0_28 = arith.constant 0 : index
    %c0_29 = arith.constant 0 : index
    %32 = vector.load %arg6[%c0_28, %c0_29] : memref<128x128xf32, #tpu.memory_space<vmem>>, vector<128x128xf32>
    tpu.vector_store %arg6[%c0_28, %c0_29], %31 {strides = array<i32>} : memref<128x128xf32, #tpu.memory_space<vmem>>, vector<128x128xf32>,
    %c0_30 = arith.constant 0 : index
    %c0_31 = arith.constant 0 : index
    %c0_32 = arith.constant 0 : index
    %33 = vector.load %arg3[%c0_30, %c0_31, %c0_32] : memref<3x1x128xf32, #tpu.memory_space<vmem>>, vector<1x1x128xf32>
    %34 = vector.shape_cast %33 : vector<1x1x128xf32> to vector<1x128xf32>
    %c1_33 = arith.constant 1 : index
    %c0_34 = arith.constant 0 : index
    %c0_35 = arith.constant 0 : index
    %35 = vector.load %arg3[%c1_33, %c0_34, %c0_35] : memref<3x1x128xf32, #tpu.memory_space<vmem>>, vector<1x1x128xf32>
    %36 = vector.shape_cast %35 : vector<1x1x128xf32> to vector<1x128xf32>
    %37 = math.exp %36 : vector<1x128xf32>
    %38 = math.log1p %37 : vector<1x128xf32>
    %c2_36 = arith.constant 2 : index
    %c0_37 = arith.constant 0 : index
    %c0_38 = arith.constant 0 : index
    %39 = vector.load %arg3[%c2_36, %c0_37, %c0_38] : memref<3x1x128xf32, #tpu.memory_space<vmem>>, vector<1x1x128xf32>
    %40 = vector.shape_cast %39 : vector<1x1x128xf32> to vector<1x128xf32>
    %41 = arith.mulf %38, %40 : vector<1x128xf32>
    %42 = arith.addf %34, %41 : vector<1x128xf32>
    %c0_39 = arith.constant 0 : index
    %c0_40 = arith.constant 0 : index
    %43 = vector.load %arg7[%c0_39, %c0_40] : memref<1x128xf32, #tpu.memory_space<vmem>>, vector<1x128xf32>
    tpu.vector_store %arg7[%c0_39, %c0_40], %42 {strides = array<i32>} : memref<1x128xf32, #tpu.memory_space<vmem>>, vector<1x128xf32>,
    return
  }
}

module attributes {stable_mosaic.version = 11 : i64} {
  func.func @_mlp_tile_kernel(%arg0: i32, %arg1: memref<8x128xf32, #tpu.memory_space<vmem>>, %arg2: memref<128x128xf32, #tpu.memory_space<vmem>>, %arg3: memref<1x128xf32, #tpu.memory_space<vmem>>, %arg4: memref<128x128xf32, #tpu.memory_space<vmem>>, %arg5: memref<1x128xf32, #tpu.memory_space<vmem>>, %arg6: memref<8x128xf32, #tpu.memory_space<vmem>>) attributes {dimension_semantics = [#tpu.dimension_semantics<parallel>], iteration_bounds = array<i64: 1>, scalar_prefetch = 0 : i64, scratch_operands = 0 : i64, tpu.core_type = #tpu.core_type<tc>, window_params = [{transform_indices = @transform_0, window_bounds = array<i64: 8, 128>}, {pipeline_mode = #tpu.pipeline_mode<synchronous>, transform_indices = @transform_1, window_bounds = array<i64: 128, 128>}, {pipeline_mode = #tpu.pipeline_mode<synchronous>, transform_indices = @transform_2, window_bounds = array<i64: 1, 128>}, {pipeline_mode = #tpu.pipeline_mode<synchronous>, transform_indices = @transform_3, window_bounds = array<i64: 128, 128>}, {pipeline_mode = #tpu.pipeline_mode<synchronous>, transform_indices = @transform_4, window_bounds = array<i64: 1, 128>}, {transform_indices = @transform_5, window_bounds = array<i64: 8, 128>}]} {
    %c0 = arith.constant 0 : index
    %c0_0 = arith.constant 0 : index
    %0 = vector.load %arg1[%c0, %c0_0] : memref<8x128xf32, #tpu.memory_space<vmem>>, vector<8x128xf32>
    %c0_1 = arith.constant 0 : index
    %c0_2 = arith.constant 0 : index
    %1 = vector.load %arg2[%c0_1, %c0_2] : memref<128x128xf32, #tpu.memory_space<vmem>>, vector<128x128xf32>
    %cst = arith.constant dense<0.000000e+00> : vector<8x128xf32>
    %2 = tpu.matmul %0, %1, %cst {dimension_numbers = #tpu.dot_dimension_numbers<[1], [0], [0], [1], [0, 0, 1, 1], [], []>} : vector<8x128xf32>, vector<128x128xf32>, vector<8x128xf32> -> vector<8x128xf32>
    %c0_3 = arith.constant 0 : index
    %c0_4 = arith.constant 0 : index
    %3 = vector.load %arg3[%c0_3, %c0_4] : memref<1x128xf32, #tpu.memory_space<vmem>>, vector<1x128xf32>
    %4 = vector.broadcast %3 : vector<1x128xf32> to vector<8x128xf32>
    %5 = arith.addf %2, %4 : vector<8x128xf32>
    %6 = arith.negf %5 : vector<8x128xf32>
    %7 = math.exp %6 : vector<8x128xf32>
    %cst_5 = arith.constant 1.000000e+00 : f32
    %8 = vector.broadcast %cst_5 : f32 to vector<8x128xf32>
    %9 = arith.addf %8, %7 : vector<8x128xf32>
    %10 = arith.divf %8, %9 : vector<8x128xf32>
    %c0_6 = arith.constant 0 : index
    %c0_7 = arith.constant 0 : index
    %11 = vector.load %arg4[%c0_6, %c0_7] : memref<128x128xf32, #tpu.memory_space<vmem>>, vector<128x128xf32>
    %cst_8 = arith.constant dense<0.000000e+00> : vector<8x128xf32>
    %12 = tpu.matmul %10, %11, %cst_8 {dimension_numbers = #tpu.dot_dimension_numbers<[1], [0], [0], [1], [0, 0, 1, 1], [], []>} : vector<8x128xf32>, vector<128x128xf32>, vector<8x128xf32> -> vector<8x128xf32>
    %c0_9 = arith.constant 0 : index
    %c0_10 = arith.constant 0 : index
    %13 = vector.load %arg5[%c0_9, %c0_10] : memref<1x128xf32, #tpu.memory_space<vmem>>, vector<1x128xf32>
    %14 = vector.broadcast %13 : vector<1x128xf32> to vector<8x128xf32>
    %15 = arith.addf %12, %14 : vector<8x128xf32>
    %c0_11 = arith.constant 0 : index
    %c0_12 = arith.constant 0 : index
    %16 = vector.load %arg6[%c0_11, %c0_12] : memref<8x128xf32, #tpu.memory_space<vmem>>, vector<8x128xf32>
    tpu.vector_store %arg6[%c0_11, %c0_12], %15 {strides = array<i32>} : memref<8x128xf32, #tpu.memory_space<vmem>>, vector<8x128xf32>,
    return
  }
  func.func @transform_0(%arg0: i32) -> (i32, i32) {
    %c0_i32 = arith.constant 0 : i32
    %c0_i32_0 = arith.constant 0 : i32
    return %arg0, %c0_i32 : i32, i32
  }
  func.func @transform_1(%arg0: i32) -> (i32, i32) {
    %c0_i32 = arith.constant 0 : i32
    %c0_i32_0 = arith.constant 0 : i32
    %c0_i32_1 = arith.constant 0 : i32
    return %c0_i32, %c0_i32_0 : i32, i32
  }
  func.func @transform_2(%arg0: i32) -> (i32, i32) {
    %c0_i32 = arith.constant 0 : i32
    %c0_i32_0 = arith.constant 0 : i32
    %c0_i32_1 = arith.constant 0 : i32
    return %c0_i32, %c0_i32_0 : i32, i32
  }
  func.func @transform_3(%arg0: i32) -> (i32, i32) {
    %c0_i32 = arith.constant 0 : i32
    %c0_i32_0 = arith.constant 0 : i32
    %c0_i32_1 = arith.constant 0 : i32
    return %c0_i32, %c0_i32_0 : i32, i32
  }
  func.func @transform_4(%arg0: i32) -> (i32, i32) {
    %c0_i32 = arith.constant 0 : i32
    %c0_i32_0 = arith.constant 0 : i32
    %c0_i32_1 = arith.constant 0 : i32
    return %c0_i32, %c0_i32_0 : i32, i32
  }
  func.func @transform_5(%arg0: i32) -> (i32, i32) {
    %c0_i32 = arith.constant 0 : i32
    %c0_i32_0 = arith.constant 0 : i32
    return %arg0, %c0_i32 : i32, i32
  }
}

</mosaic_0001>

<llo_original>
// kernel: mlp_bbb_forward.3
$region0: #{mlp_bbb_forward.3}
  #allocation0 [shape = 'u32[]', space=smem, size = 0x4, offset = 0x4, fixed_abs, tag = 'smem constant byte address 0x4 - core index']
  #allocation1 [shape = 'u32[144,128]{1,0:T(1,128)}', space=vmem, size = 0x12000, scoped, tag = 'internal scratch']
  %s0 = inlined_call_operand.vmem [shape: f32[8,128], index: 0, kind: input, shape index: {}]
  %s1 = inlined_call_operand.vmem [shape: f32[128,128], index: 1, kind: input, shape index: {}]
  %s2 = inlined_call_operand.vmem [shape: f32[1,128], index: 2, kind: input, shape index: {}]
  %s3 = inlined_call_operand.vmem [shape: f32[128,128], index: 3, kind: input, shape index: {}]
  %s4 = inlined_call_operand.vmem [shape: f32[1,128], index: 4, kind: input, shape index: {}]
  %s5 = inlined_call_operand.hbm [shape: f32[8,128], index: 5, kind: output, shape index: {}]
  %s6 = sld [smem:[#allocation0]]
  $region30: #{mlp_bbb_forward.3} parent=0
    _
  %s8 = ssub.s32 1, %s6
  %s9 = scalar_select 0, %s8, %s6
  $region1: #{mlp_bbb_forward.3} parent=0
    #allocation2 [shape = 'u8[4096]{0}', space=vmem, size = 0x1000, scoped, tag = 'output window, operand 0, single buffered']
    #allocation3 [shape = 's32[1]{0}', space=sflag, size = 0x4, scoped, tag = 'scoped memory for mlp_bbb_forward.3']
    %10 = vsyncpa [#allocation3], 0
    // Predicated region
    $region2: #{mlp_bbb_forward.3} parent=1 // pred_check
      _
    $region3: #{mlp_bbb_forward.3} parent=1 // pred_check_branch
      %12 = sbr.rel (0) target = $region5
    $region4: #{mlp_bbb_forward.3} parent=1 // pred_region
      _
    $region5: #{mlp_bbb_forward.3} parent=1 // pred_fallthru
      _
    // Predicated region
    $region6: #{mlp_bbb_forward.3} parent=1 // pred_check
      _
    $region7: #{mlp_bbb_forward.3} parent=1 // pred_check_branch
      %14 = sbr.rel (0) target = $region9
    $region8: #{mlp_bbb_forward.3} parent=1 // pred_region
      _
    $region9: #{mlp_bbb_forward.3} parent=1 // pred_fallthru
      _
    // Predicated region
    $region10: #{mlp_bbb_forward.3} parent=1 // pred_check
      _
    $region11: #{mlp_bbb_forward.3} parent=1 // pred_check_branch
      %16 = sbr.rel (0) target = $region13
    $region12: #{mlp_bbb_forward.3} parent=1 // pred_region
      _
    $region13: #{mlp_bbb_forward.3} parent=1 // pred_fallthru
      _
    // Predicated region
    $region14: #{mlp_bbb_forward.3} parent=1 // pred_check
      _
    $region15: #{mlp_bbb_forward.3} parent=1 // pred_check_branch
      %18 = sbr.rel (0) target = $region17
    $region16: #{mlp_bbb_forward.3} parent=1 // pred_region
      _
    $region17: #{mlp_bbb_forward.3} parent=1 // pred_fallthru
      _
    // Predicated region
    $region18: #{mlp_bbb_forward.3} parent=1 // pred_check
      _
    $region19: #{mlp_bbb_forward.3} parent=1 // pred_check_branch
      %20 = sbr.rel (0) target = $region21
    $region20: #{mlp_bbb_forward.3} parent=1 // pred_region
      _
    $region21: #{mlp_bbb_forward.3} parent=1 // pred_fallthru
      _
    %v21 = vld [vmem:[%s0] sm:$0xff]
    %v22 = vld [vmem:[%s1] sm:$0xff]
    %v23 = vld [vmem:[%s1 + $0x8] sm:$0xff]
    %v24 = vld [vmem:[%s1 + $0x10] sm:$0xff]
    %v25 = vld [vmem:[%s1 + $0x18] sm:$0xff]
    %v26 = vld [vmem:[%s1 + $0x20] sm:$0xff]
    %v27 = vld [vmem:[%s1 + $0x28] sm:$0xff]
    %v28 = vld [vmem:[%s1 + $0x30] sm:$0xff]
    %v29 = vld [vmem:[%s1 + $0x38] sm:$0xff]
    %v30 = vld [vmem:[%s1 + $0x40] sm:$0xff]
    %v31 = vld [vmem:[%s1 + $0x48] sm:$0xff]
    %v32 = vld [vmem:[%s1 + $0x50] sm:$0xff]
    %v33 = vld [vmem:[%s1 + $0x58] sm:$0xff]
    %v34 = vld [vmem:[%s1 + $0x60] sm:$0xff]
    %v35 = vld [vmem:[%s1 + $0x68] sm:$0xff]
    %v36 = vld [vmem:[%s1 + $0x70] sm:$0xff]
    %v37 = vld [vmem:[%s1 + $0x78] sm:$0xff]
    %v38 = vld [vmem:[%s2] sm:$0x1]
    %v40 = vlaneseq
    %v41 = vshrl.u32 %v40, 7
    %v42 = vsub.s32 0, %v41
    %v43 = vrot.slane %v38, %v42
    %45 = vmatprep.subr.mxu0 0.0
    %46 = vmatpush1.msra.mxu0 %v22
    %47 = vmatprep.subr.mxu0 0.0
    %48 = vmatpush1.msra.mxu0 %v23
    %49 = vmatprep.subr.mxu0 0.0
    %50 = vmatpush1.msra.mxu0 %v24
    %51 = vmatprep.subr.mxu0 0.0
    %52 = vmatpush1.msra.mxu0 %v25
    %53 = vmatprep.subr.mxu0 0.0
    %54 = vmatpush1.msra.mxu0 %v26
    %55 = vmatprep.subr.mxu0 0.0
    %56 = vmatpush1.msra.mxu0 %v27
    %57 = vmatprep.subr.mxu0 0.0
    %58 = vmatpush1.msra.mxu0 %v28
    %59 = vmatprep.subr.mxu0 0.0
    %60 = vmatpush1.msra.mxu0 %v29
    %61 = vmatprep.subr.mxu0 0.0
    %62 = vmatpush1.msra.mxu0 %v30
    %63 = vmatprep.subr.mxu0 0.0
    %64 = vmatpush1.msra.mxu0 %v31
    %65 = vmatprep.subr.mxu0 0.0
    %66 = vmatpush1.msra.mxu0 %v32
    %67 = vmatprep.subr.mxu0 0.0
    %68 = vmatpush1.msra.mxu0 %v33
    %69 = vmatprep.subr.mxu0 0.0
    %70 = vmatpush1.msra.mxu0 %v34
    %71 = vmatprep.subr.mxu0 0.0
    %72 = vmatpush1.msra.mxu0 %v35
    %73 = vmatprep.subr.mxu0 0.0
    %74 = vmatpush1.msra.mxu0 %v36
    %75 = vmatprep.subr.mxu0 0.0
    %76 = vmatpush1.msra.mxu0 %v37
    %77 = vmatprep.subr.mxu0 0.0
    %78 = vmatpush1.msra.mxu0 0.0
    %79 = vmatprep.subr.mxu0 0.0
    %80 = vmatpush1.msra.mxu0 0.0
    %81 = vmatprep.subr.mxu0 0.0
    %82 = vmatpush1.msra.mxu0 0.0
    %83 = vmatprep.subr.mxu0 0.0
    %84 = vmatpush1.msra.mxu0 0.0
    %85 = vmatprep.subr.mxu0 0.0
    %86 = vmatpush1.msra.mxu0 0.0
    %87 = vmatprep.subr.mxu0 0.0
    %88 = vmatpush1.msra.mxu0 0.0
    %89 = vmatprep.subr.mxu0 0.0
    %90 = vmatpush1.msra.mxu0 0.0
    %91 = vmatprep.subr.mxu0 0.0
    %92 = vmatpush1.msra.mxu0 0.0
    %93 = vmatprep.subr.mxu0 0.0
    %94 = vmatpush1.msra.mxu0 0.0
    %95 = vmatprep.subr.mxu0 0.0
    %96 = vmatpush1.msra.mxu0 0.0
    %97 = vmatprep.subr.mxu0 0.0
    %98 = vmatpush1.msra.mxu0 0.0
    %99 = vmatprep.subr.mxu0 0.0
    %100 = vmatpush1.msra.mxu0 0.0
    %101 = vmatprep.subr.mxu0 0.0
    %102 = vmatpush1.msra.mxu0 0.0
    %103 = vmatprep.subr.mxu0 0.0
    %104 = vmatpush1.msra.mxu0 0.0
    %105 = vmatprep.subr.mxu0 0.0
    %106 = vmatpush1.msra.mxu0 0.0
    %107 = vmatprep.subr.mxu0 0.0
    %108 = vmatpush1.msra.mxu0 0.0
    %109 = vmatprep.mubr.f32.mxu0 0.0
    %110 = vmatmul.mubr.f32.gmra.mrb[0].mxu0 %v21
    %v111 = vpop.f32.mrb[0].mxu0
    %v112 = vadd.f32 %v43, %v111
    %v113 = vpop.f32.mrb[0].mxu0
    %114 = vdwg.mxu0
    %v115 = vxor.u32 %v112, 2147483648
    %v116 = vmul.f32 %v115, 1.442695
    %v117 = vpow.pop %v116
    %v118 = vadd.f32 %v117, 1.0
    %v119 = vrcp.pop %v118
    %v120 = vmul.f32 1.0, %v119
    %v121 = vld [vmem:[%s3] sm:$0xff]
    %v122 = vld [vmem:[%s3 + $0x8] sm:$0xff]
    %v123 = vld [vmem:[%s3 + $0x10] sm:$0xff]
    %v124 = vld [vmem:[%s3 + $0x18] sm:$0xff]
    %v125 = vld [vmem:[%s3 + $0x20] sm:$0xff]
    %v126 = vld [vmem:[%s3 + $0x28] sm:$0xff]
    %v127 = vld [vmem:[%s3 + $0x30] sm:$0xff]
    %v128 = vld [vmem:[%s3 + $0x38] sm:$0xff]
    %v129 = vld [vmem:[%s3 + $0x40] sm:$0xff]
    %v130 = vld [vmem:[%s3 + $0x48] sm:$0xff]
    %v131 = vld [vmem:[%s3 + $0x50] sm:$0xff]
    %v132 = vld [vmem:[%s3 + $0x58] sm:$0xff]
    %v133 = vld [vmem:[%s3 + $0x60] sm:$0xff]
    %v134 = vld [vmem:[%s3 + $0x68] sm:$0xff]
    %v135 = vld [vmem:[%s3 + $0x70] sm:$0xff]
    %v136 = vld [vmem:[%s3 + $0x78] sm:$0xff]
    %v137 = vld [vmem:[%s4] sm:$0x1]
    %v139 = vlaneseq
    %v140 = vshrl.u32 %v139, 7
    %v141 = vsub.s32 0, %v140
    %v142 = vrot.slane %v137, %v141
    %144 = vmatprep.subr.mxu0 0.0
    %145 = vmatpush1.msra.mxu0 %v121
    %146 = vmatprep.subr.mxu0 0.0
    %147 = vmatpush1.msra.mxu0 %v122
    %148 = vmatprep.subr.mxu0 0.0
    %149 = vmatpush1.msra.mxu0 %v123
    %150 = vmatprep.subr.mxu0 0.0
    %151 = vmatpush1.msra.mxu0 %v124
    %152 = vmatprep.subr.mxu0 0.0
    %153 = vmatpush1.msra.mxu0 %v125
    %154 = vmatprep.subr.mxu0 0.0
    %155 = vmatpush1.msra.mxu0 %v126
    %156 = vmatprep.subr.mxu0 0.0
    %157 = vmatpush1.msra.mxu0 %v127
    %158 = vmatprep.subr.mxu0 0.0
    %159 = vmatpush1.msra.mxu0 %v128
    %160 = vmatprep.subr.mxu0 0.0
    %161 = vmatpush1.msra.mxu0 %v129
    %162 = vmatprep.subr.mxu0 0.0
    %163 = vmatpush1.msra.mxu0 %v130
    %164 = vmatprep.subr.mxu0 0.0
    %165 = vmatpush1.msra.mxu0 %v131
    %166 = vmatprep.subr.mxu0 0.0
    %167 = vmatpush1.msra.mxu0 %v132
    %168 = vmatprep.subr.mxu0 0.0
    %169 = vmatpush1.msra.mxu0 %v133
    %170 = vmatprep.subr.mxu0 0.0
    %171 = vmatpush1.msra.mxu0 %v134
    %172 = vmatprep.subr.mxu0 0.0
    %173 = vmatpush1.msra.mxu0 %v135
    %174 = vmatprep.subr.mxu0 0.0
    %175 = vmatpush1.msra.mxu0 %v136
    %176 = vmatprep.subr.mxu0 0.0
    %177 = vmatpush1.msra.mxu0 0.0
    %178 = vmatprep.subr.mxu0 0.0
    %179 = vmatpush1.msra.mxu0 0.0
    %180 = vmatprep.subr.mxu0 0.0
    %181 = vmatpush1.msra.mxu0 0.0
    %182 = vmatprep.subr.mxu0 0.0
    %183 = vmatpush1.msra.mxu0 0.0
    %184 = vmatprep.subr.mxu0 0.0
    %185 = vmatpush1.msra.mxu0 0.0
    %186 = vmatprep.subr.mxu0 0.0
    %187 = vmatpush1.msra.mxu0 0.0
    %188 = vmatprep.subr.mxu0 0.0
    %189 = vmatpush1.msra.mxu0 0.0
    %190 = vmatprep.subr.mxu0 0.0
    %191 = vmatpush1.msra.mxu0 0.0
    %192 = vmatprep.subr.mxu0 0.0
    %193 = vmatpush1.msra.mxu0 0.0
    %194 = vmatprep.subr.mxu0 0.0
    %195 = vmatpush1.msra.mxu0 0.0
    %196 = vmatprep.subr.mxu0 0.0
    %197 = vmatpush1.msra.mxu0 0.0
    %198 = vmatprep.subr.mxu0 0.0
    %199 = vmatpush1.msra.mxu0 0.0
    %200 = vmatprep.subr.mxu0 0.0
    %201 = vmatpush1.msra.mxu0 0.0
    %202 = vmatprep.subr.mxu0 0.0
    %203 = vmatpush1.msra.mxu0 0.0
    %204 = vmatprep.subr.mxu0 0.0
    %205 = vmatpush1.msra.mxu0 0.0
    %206 = vmatprep.subr.mxu0 0.0
    %207 = vmatpush1.msra.mxu0 0.0
    %208 = vmatprep.mubr.f32.mxu0 0.0
    %209 = vmatmul.mubr.f32.gmra.mrb[0].mxu0 %v120
    %v210 = vpop.f32.mrb[0].mxu0
    %v211 = vadd.f32 %v142, %v210
    %v212 = vpop.f32.mrb[0].mxu0
    %213 = vdwg.mxu0
    %214 = vst [vmem:[#allocation2] sm:$0xff] %v211
    // Predicated region
    $region22: #{mlp_bbb_forward.3} parent=1 // pred_check
      _
    $region23: #{mlp_bbb_forward.3} parent=1 // pred_check_branch
      %216 = sbr.rel (0) target = $region25
    $region24: #{mlp_bbb_forward.3} parent=1 // pred_region
      %s218 = ssub.s32 128, 128
      %219 = vsyncadd [#allocation3], %s218
      %s221 = sshll.u32 [#allocation2], 4
      %s222 = int_to_ptr.vmem [resolvable:$true] %s221
      %224 = dma.vmem_to_hbm [thread:$0]  %s222, 128, %s5, [#allocation3]
    $region25: #{mlp_bbb_forward.3} parent=1 // pred_fallthru
      _
    // Predicated region
    $region26: #{mlp_bbb_forward.3} parent=1 // pred_check
      _
    $region27: #{mlp_bbb_forward.3} parent=1 // pred_check_branch
      %226 = sbr.rel (0) target = $region29
    $region28: #{mlp_bbb_forward.3} parent=1 // pred_region
      %227 = dma.done [#allocation3], 128
    $region29: #{mlp_bbb_forward.3} parent=1 // pred_fallthru
      _
    %228 = vsyncpa [#allocation3], 1

// kernel: mlp_bbb_forward.2
$region0: #{mlp_bbb_forward.2}
  #allocation0 [shape = 'u32[]', space=smem, size = 0x4, offset = 0x4, fixed_abs, tag = 'smem constant byte address 0x4 - core index']
  #allocation1 [shape = 'u32[144,128]{1,0:T(1,128)}', space=vmem, size = 0x12000, scoped, tag = 'internal scratch']
  %s0 = inlined_call_operand.vmem [shape: f32[3,128,128], index: 0, kind: input, shape index: {}]
  %s1 = inlined_call_operand.vmem [shape: f32[3,1,128], index: 1, kind: input, shape index: {}]
  %s2 = inlined_call_operand.vmem [shape: f32[3,128,128], index: 2, kind: input, shape index: {}]
  %s3 = inlined_call_operand.vmem [shape: f32[3,1,128], index: 3, kind: input, shape index: {}]
  %s4 = inlined_call_operand.vmem [shape: f32[128,128], index: 4, kind: output, shape index: {0}]
  %s5 = inlined_call_operand.vmem [shape: f32[1,128], index: 5, kind: output, shape index: {1}]
  %s6 = inlined_call_operand.vmem [shape: f32[128,128], index: 6, kind: output, shape index: {2}]
  %s7 = inlined_call_operand.vmem [shape: f32[1,128], index: 7, kind: output, shape index: {3}]
  %8 = xla_tuple %s4, %s5, %s6, %s7
  %s9 = sld [smem:[#allocation0]]
  $region50: #{mlp_bbb_forward.2} parent=0
    _
  %s11 = ssub.s32 1, %s9
  %s12 = scalar_select 0, %s11, %s9
  // Predicated region
  $region2: #{mlp_bbb_forward.2} parent=0 // pred_check
    _
  $region3: #{mlp_bbb_forward.2} parent=0 // pred_check_branch
    %14 = sbr.rel (0) target = $region5
  $region4: #{mlp_bbb_forward.2} parent=0 // pred_region
    _
  $region5: #{mlp_bbb_forward.2} parent=0 // pred_fallthru
    _
  // Predicated region
  $region6: #{mlp_bbb_forward.2} parent=0 // pred_check
    _
  $region7: #{mlp_bbb_forward.2} parent=0 // pred_check_branch
    %16 = sbr.rel (0) target = $region9
  $region8: #{mlp_bbb_forward.2} parent=0 // pred_region
    _
  $region9: #{mlp_bbb_forward.2} parent=0 // pred_fallthru
    _
  // Predicated region
  $region10: #{mlp_bbb_forward.2} parent=0 // pred_check
    _
  $region11: #{mlp_bbb_forward.2} parent=0 // pred_check_branch
    %18 = sbr.rel (0) target = $region13
  $region12: #{mlp_bbb_forward.2} parent=0 // pred_region
    _
  $region13: #{mlp_bbb_forward.2} parent=0 // pred_fallthru
    _
  // Predicated region
  $region14: #{mlp_bbb_forward.2} parent=0 // pred_check
    _
  $region15: #{mlp_bbb_forward.2} parent=0 // pred_check_branch
    %20 = sbr.rel (0) target = $region17
  $region16: #{mlp_bbb_forward.2} parent=0 // pred_region
    _
  $region17: #{mlp_bbb_forward.2} parent=0 // pred_fallthru
    _
  %v21 = vld [vmem:[%s0] sm:$0xff]
  %v22 = vld [vmem:[%s0 + $0x8] sm:$0xff]
  %v23 = vld [vmem:[%s0 + $0x10] sm:$0xff]
  %v24 = vld [vmem:[%s0 + $0x18] sm:$0xff]
  %v25 = vld [vmem:[%s0 + $0x20] sm:$0xff]
  %v26 = vld [vmem:[%s0 + $0x28] sm:$0xff]
  %v27 = vld [vmem:[%s0 + $0x30] sm:$0xff]
  %v28 = vld [vmem:[%s0 + $0x38] sm:$0xff]
  %v29 = vld [vmem:[%s0 + $0x40] sm:$0xff]
  %v30 = vld [vmem:[%s0 + $0x48] sm:$0xff]
  %v31 = vld [vmem:[%s0 + $0x50] sm:$0xff]
  %v32 = vld [vmem:[%s0 + $0x58] sm:$0xff]
  %v33 = vld [vmem:[%s0 + $0x60] sm:$0xff]
  %v34 = vld [vmem:[%s0 + $0x68] sm:$0xff]
  %v35 = vld [vmem:[%s0 + $0x70] sm:$0xff]
  %v36 = vld [vmem:[%s0 + $0x78] sm:$0xff]
  %s37 = scalar_lea.vmem %s0, 128
  %v38 = vld [vmem:[%s37] sm:$0xff]
  %v39 = vld [vmem:[%s37 + $0x8] sm:$0xff]
  %v40 = vld [vmem:[%s37 + $0x10] sm:$0xff]
  %v41 = vld [vmem:[%s37 + $0x18] sm:$0xff]
  %v42 = vld [vmem:[%s37 + $0x20] sm:$0xff]
  %v43 = vld [vmem:[%s37 + $0x28] sm:$0xff]
  %v44 = vld [vmem:[%s37 + $0x30] sm:$0xff]
  %v45 = vld [vmem:[%s37 + $0x38] sm:$0xff]
  %v46 = vld [vmem:[%s37 + $0x40] sm:$0xff]
  %v47 = vld [vmem:[%s37 + $0x48] sm:$0xff]
  %v48 = vld [vmem:[%s37 + $0x50] sm:$0xff]
  %v49 = vld [vmem:[%s37 + $0x58] sm:$0xff]
  %v50 = vld [vmem:[%s37 + $0x60] sm:$0xff]
  %v51 = vld [vmem:[%s37 + $0x68] sm:$0xff]
  %v52 = vld [vmem:[%s37 + $0x70] sm:$0xff]
  %v53 = vld [vmem:[%s37 + $0x78] sm:$0xff]
  %v54 = vmul.f32 %v38, 1.442695
  %v55 = vpow.pop %v54
  %v56 = vmul.f32 %v39, 1.442695
  %v57 = vpow.pop %v56
  %v58 = vmul.f32 %v40, 1.442695
  %v59 = vpow.pop %v58
  %v60 = vmul.f32 %v41, 1.442695
  %v61 = vpow.pop %v60
  %v62 = vmul.f32 %v42, 1.442695
  %v63 = vpow.pop %v62
  %v64 = vmul.f32 %v43, 1.442695
  %v65 = vpow.pop %v64
  %v66 = vmul.f32 %v44, 1.442695
  %v67 = vpow.pop %v66
  %v68 = vmul.f32 %v45, 1.442695
  %v69 = vpow.pop %v68
  %v70 = vmul.f32 %v46, 1.442695
  %v71 = vpow.pop %v70
  %v72 = vmul.f32 %v47, 1.442695
  %v73 = vpow.pop %v72
  %v74 = vmul.f32 %v48, 1.442695
  %v75 = vpow.pop %v74
  %v76 = vmul.f32 %v49, 1.442695
  %v77 = vpow.pop %v76
  %v78 = vmul.f32 %v50, 1.442695
  %v79 = vpow.pop %v78
  %v80 = vmul.f32 %v51, 1.442695
  %v81 = vpow.pop %v80
  %v82 = vmul.f32 %v52, 1.442695
  %v83 = vpow.pop %v82
  %v84 = vmul.f32 %v53, 1.442695
  %v85 = vpow.pop %v84
  %v86 = vadd.f32 %v55, 1.0
  %v87 = vlog2.pop %v86
  %v88 = vmul.f32 %v87, 0.6931472
  %v89 = vmul.f32 -0.5, %v55
  %v90 = vadd.f32 %v89, 1.0
  %v91 = vmul.f32 %v90, %v55
  %v92 = vand.u32 2147483647, %v55
  %vm93 = vcmp.lt.f32.partialorder %v92, 0.0004427343
  %v94 = vsel %vm93, %v91, %v88
  %v95 = vadd.f32 %v57, 1.0
  %v96 = vlog2.pop %v95
  %v97 = vmul.f32 %v96, 0.6931472
  %v98 = vmul.f32 -0.5, %v57
  %v99 = vadd.f32 %v98, 1.0
  %v100 = vmul.f32 %v99, %v57
  %v101 = vand.u32 2147483647, %v57
  %vm102 = vcmp.lt.f32.partialorder %v101, 0.0004427343
  %v103 = vsel %vm102, %v100, %v97
  %v104 = vadd.f32 %v59, 1.0
  %v105 = vlog2.pop %v104
  %v106 = vmul.f32 %v105, 0.6931472
  %v107 = vmul.f32 -0.5, %v59
  %v108 = vadd.f32 %v107, 1.0
  %v109 = vmul.f32 %v108, %v59
  %v110 = vand.u32 2147483647, %v59
  %vm111 = vcmp.lt.f32.partialorder %v110, 0.0004427343
  %v112 = vsel %vm111, %v109, %v106
  %v113 = vadd.f32 %v61, 1.0
  %v114 = vlog2.pop %v113
  %v115 = vmul.f32 %v114, 0.6931472
  %v116 = vmul.f32 -0.5, %v61
  %v117 = vadd.f32 %v116, 1.0
  %v118 = vmul.f32 %v117, %v61
  %v119 = vand.u32 2147483647, %v61
  %vm120 = vcmp.lt.f32.partialorder %v119, 0.0004427343
  %v121 = vsel %vm120, %v118, %v115
  %v122 = vadd.f32 %v63, 1.0
  %v123 = vlog2.pop %v122
  %v124 = vmul.f32 %v123, 0.6931472
  %v125 = vmul.f32 -0.5, %v63
  %v126 = vadd.f32 %v125, 1.0
  %v127 = vmul.f32 %v126, %v63
  %v128 = vand.u32 2147483647, %v63
  %vm129 = vcmp.lt.f32.partialorder %v128, 0.0004427343
  %v130 = vsel %vm129, %v127, %v124
  %v131 = vadd.f32 %v65, 1.0
  %v132 = vlog2.pop %v131
  %v133 = vmul.f32 %v132, 0.6931472
  %v134 = vmul.f32 -0.5, %v65
  %v135 = vadd.f32 %v134, 1.0
  %v136 = vmul.f32 %v135, %v65
  %v137 = vand.u32 2147483647, %v65
  %vm138 = vcmp.lt.f32.partialorder %v137, 0.0004427343
  %v139 = vsel %vm138, %v136, %v133
  %v140 = vadd.f32 %v67, 1.0
  %v141 = vlog2.pop %v140
  %v142 = vmul.f32 %v141, 0.6931472
  %v143 = vmul.f32 -0.5, %v67
  %v144 = vadd.f32 %v143, 1.0
  %v145 = vmul.f32 %v144, %v67
  %v146 = vand.u32 2147483647, %v67
  %vm147 = vcmp.lt.f32.partialorder %v146, 0.0004427343
  %v148 = vsel %vm147, %v145, %v142
  %v149 = vadd.f32 %v69, 1.0
  %v150 = vlog2.pop %v149
  %v151 = vmul.f32 %v150, 0.6931472
  %v152 = vmul.f32 -0.5, %v69
  %v153 = vadd.f32 %v152, 1.0
  %v154 = vmul.f32 %v153, %v69
  %v155 = vand.u32 2147483647, %v69
  %vm156 = vcmp.lt.f32.partialorder %v155, 0.0004427343
  %v157 = vsel %vm156, %v154, %v151
  %v158 = vadd.f32 %v71, 1.0
  %v159 = vlog2.pop %v158
  %v160 = vmul.f32 %v159, 0.6931472
  %v161 = vmul.f32 -0.5, %v71
  %v162 = vadd.f32 %v161, 1.0
  %v163 = vmul.f32 %v162, %v71
  %v164 = vand.u32 2147483647, %v71
  %vm165 = vcmp.lt.f32.partialorder %v164, 0.0004427343
  %v166 = vsel %vm165, %v163, %v160
  %v167 = vadd.f32 %v73, 1.0
  %v168 = vlog2.pop %v167
  %v169 = vmul.f32 %v168, 0.6931472
  %v170 = vmul.f32 -0.5, %v73
  %v171 = vadd.f32 %v170, 1.0
  %v172 = vmul.f32 %v171, %v73
  %v173 = vand.u32 2147483647, %v73
  %vm174 = vcmp.lt.f32.partialorder %v173, 0.0004427343
  %v175 = vsel %vm174, %v172, %v169
  %v176 = vadd.f32 %v75, 1.0
  %v177 = vlog2.pop %v176
  %v178 = vmul.f32 %v177, 0.6931472
  %v179 = vmul.f32 -0.5, %v75
  %v180 = vadd.f32 %v179, 1.0
  %v181 = vmul.f32 %v180, %v75
  %v182 = vand.u32 2147483647, %v75
  %vm183 = vcmp.lt.f32.partialorder %v182, 0.0004427343
  %v184 = vsel %vm183, %v181, %v178
  %v185 = vadd.f32 %v77, 1.0
  %v186 = vlog2.pop %v185
  %v187 = vmul.f32 %v186, 0.6931472
  %v188 = vmul.f32 -0.5, %v77
  %v189 = vadd.f32 %v188, 1.0
  %v190 = vmul.f32 %v189, %v77
  %v191 = vand.u32 2147483647, %v77
  %vm192 = vcmp.lt.f32.partialorder %v191, 0.0004427343
  %v193 = vsel %vm192, %v190, %v187
  %v194 = vadd.f32 %v79, 1.0
  %v195 = vlog2.pop %v194
  %v196 = vmul.f32 %v195, 0.6931472
  %v197 = vmul.f32 -0.5, %v79
  %v198 = vadd.f32 %v197, 1.0
  %v199 = vmul.f32 %v198, %v79
  %v200 = vand.u32 2147483647, %v79
  %vm201 = vcmp.lt.f32.partialorder %v200, 0.0004427343
  %v202 = vsel %vm201, %v199, %v196
  %v203 = vadd.f32 %v81, 1.0
  %v204 = vlog2.pop %v203
  %v205 = vmul.f32 %v204, 0.6931472
  %v206 = vmul.f32 -0.5, %v81
  %v207 = vadd.f32 %v206, 1.0
  %v208 = vmul.f32 %v207, %v81
  %v209 = vand.u32 2147483647, %v81
  %vm210 = vcmp.lt.f32.partialorder %v209, 0.0004427343
  %v211 = vsel %vm210, %v208, %v205
  %v212 = vadd.f32 %v83, 1.0
  %v213 = vlog2.pop %v212
  %v214 = vmul.f32 %v213, 0.6931472
  %v215 = vmul.f32 -0.5, %v83
  %v216 = vadd.f32 %v215, 1.0
  %v217 = vmul.f32 %v216, %v83
  %v218 = vand.u32 2147483647, %v83
  %vm219 = vcmp.lt.f32.partialorder %v218, 0.0004427343
  %v220 = vsel %vm219, %v217, %v214
  %v221 = vadd.f32 %v85, 1.0
  %v222 = vlog2.pop %v221
  %v223 = vmul.f32 %v222, 0.6931472
  %v224 = vmul.f32 -0.5, %v85
  %v225 = vadd.f32 %v224, 1.0
  %v226 = vmul.f32 %v225, %v85
  %v227 = vand.u32 2147483647, %v85
  %vm228 = vcmp.lt.f32.partialorder %v227, 0.0004427343
  %v229 = vsel %vm228, %v226, %v223
  %s230 = scalar_lea.vmem %s0, 256
  %v231 = vld [vmem:[%s230] sm:$0xff]
  %v232 = vld [vmem:[%s230 + $0x8] sm:$0xff]
  %v233 = vld [vmem:[%s230 + $0x10] sm:$0xff]
  %v234 = vld [vmem:[%s230 + $0x18] sm:$0xff]
  %v235 = vld [vmem:[%s230 + $0x20] sm:$0xff]
  %v236 = vld [vmem:[%s230 + $0x28] sm:$0xff]
  %v237 = vld [vmem:[%s230 + $0x30] sm:$0xff]
  %v238 = vld [vmem:[%s230 + $0x38] sm:$0xff]
  %v239 = vld [vmem:[%s230 + $0x40] sm:$0xff]
  %v240 = vld [vmem:[%s230 + $0x48] sm:$0xff]
  %v241 = vld [vmem:[%s230 + $0x50] sm:$0xff]
  %v242 = vld [vmem:[%s230 + $0x58] sm:$0xff]
  %v243 = vld [vmem:[%s230 + $0x60] sm:$0xff]
  %v244 = vld [vmem:[%s230 + $0x68] sm:$0xff]
  %v245 = vld [vmem:[%s230 + $0x70] sm:$0xff]
  %v246 = vld [vmem:[%s230 + $0x78] sm:$0xff]
  %v247 = vmul.f32 %v94, %v231
  %v248 = vmul.f32 %v103, %v232
  %v249 = vmul.f32 %v112, %v233
  %v250 = vmul.f32 %v121, %v234
  %v251 = vmul.f32 %v130, %v235
  %v252 = vmul.f32 %v139, %v236
  %v253 = vmul.f32 %v148, %v237
  %v254 = vmul.f32 %v157, %v238
  %v255 = vmul.f32 %v166, %v239
  %v256 = vmul.f32 %v175, %v240
  %v257 = vmul.f32 %v184, %v241
  %v258 = vmul.f32 %v193, %v242
  %v259 = vmul.f32 %v202, %v243
  %v260 = vmul.f32 %v211, %v244
  %v261 = vmul.f32 %v220, %v245
  %v262 = vmul.f32 %v229, %v246
  %v263 = vadd.f32 %v21, %v247
  %v264 = vadd.f32 %v22, %v248
  %v265 = vadd.f32 %v23, %v249
  %v266 = vadd.f32 %v24, %v250
  %v267 = vadd.f32 %v25, %v251
  %v268 = vadd.f32 %v26, %v252
  %v269 = vadd.f32 %v27, %v253
  %v270 = vadd.f32 %v28, %v254
  %v271 = vadd.f32 %v29, %v255
  %v272 = vadd.f32 %v30, %v256
  %v273 = vadd.f32 %v31, %v257
  %v274 = vadd.f32 %v32, %v258
  %v275 = vadd.f32 %v33, %v259
  %v276 = vadd.f32 %v34, %v260
  %v277 = vadd.f32 %v35, %v261
  %v278 = vadd.f32 %v36, %v262
  %279 = vst [vmem:[%s4] sm:$0xff] %v263
  %280 = vst [vmem:[%s4 + $0x8] sm:$0xff] %v264
  %281 = vst [vmem:[%s4 + $0x10] sm:$0xff] %v265
  %282 = vst [vmem:[%s4 + $0x18] sm:$0xff] %v266
  %283 = vst [vmem:[%s4 + $0x20] sm:$0xff] %v267
  %284 = vst [vmem:[%s4 + $0x28] sm:$0xff] %v268
  %285 = vst [vmem:[%s4 + $0x30] sm:$0xff] %v269
  %286 = vst [vmem:[%s4 + $0x38] sm:$0xff] %v270
  %287 = vst [vmem:[%s4 + $0x40] sm:$0xff] %v271
  %288 = vst [vmem:[%s4 + $0x48] sm:$0xff] %v272
  %289 = vst [vmem:[%s4 + $0x50] sm:$0xff] %v273
  %290 = vst [vmem:[%s4 + $0x58] sm:$0xff] %v274
  %291 = vst [vmem:[%s4 + $0x60] sm:$0xff] %v275
  %292 = vst [vmem:[%s4 + $0x68] sm:$0xff] %v276
  %293 = vst [vmem:[%s4 + $0x70] sm:$0xff] %v277
  %294 = vst [vmem:[%s4 + $0x78] sm:$0xff] %v278
  %v295 = vld [vmem:[%s1] sm:$0x1]
  %s296 = scalar_lea.vmem %s1, 1
  %v297 = vld [vmem:[%s296] sm:$0x1]
  %v298 = vmul.f32 %v297, 1.442695
  %v299 = vpow.pop %v298
  %v300 = vadd.f32 %v299, 1.0
  %v301 = vlog2.pop %v300
  %v302 = vmul.f32 %v301, 0.6931472
  %v303 = vmul.f32 -0.5, %v299
  %v304 = vadd.f32 %v303, 1.0
  %v305 = vmul.f32 %v304, %v299
  %v306 = vand.u32 2147483647, %v299
  %vm307 = vcmp.lt.f32.partialorder %v306, 0.0004427343
  %v308 = vsel %vm307, %v305, %v302
  %s309 = scalar_lea.vmem %s1, 2
  %v310 = vld [vmem:[%s309] sm:$0x1]
  %v311 = vmul.f32 %v308, %v310
  %v312 = vadd.f32 %v295, %v311
  %313 = vst [vmem:[%s5] sm:$0x1] %v312
  %v314 = vld [vmem:[%s2] sm:$0xff]
  %v315 = vld [vmem:[%s2 + $0x8] sm:$0xff]
  %v316 = vld [vmem:[%s2 + $0x10] sm:$0xff]
  %v317 = vld [vmem:[%s2 + $0x18] sm:$0xff]
  %v318 = vld [vmem:[%s2 + $0x20] sm:$0xff]
  %v319 = vld [vmem:[%s2 + $0x28] sm:$0xff]
  %v320 = vld [vmem:[%s2 + $0x30] sm:$0xff]
  %v321 = vld [vmem:[%s2 + $0x38] sm:$0xff]
  %v322 = vld [vmem:[%s2 + $0x40] sm:$0xff]
  %v323 = vld [vmem:[%s2 + $0x48] sm:$0xff]
  %v324 = vld [vmem:[%s2 + $0x50] sm:$0xff]
  %v325 = vld [vmem:[%s2 + $0x58] sm:$0xff]
  %v326 = vld [vmem:[%s2 + $0x60] sm:$0xff]
  %v327 = vld [vmem:[%s2 + $0x68] sm:$0xff]
  %v328 = vld [vmem:[%s2 + $0x70] sm:$0xff]
  %v329 = vld [vmem:[%s2 + $0x78] sm:$0xff]
  %s330 = scalar_lea.vmem %s2, 128
  %v331 = vld [vmem:[%s330] sm:$0xff]
  %v332 = vld [vmem:[%s330 + $0x8] sm:$0xff]
  %v333 = vld [vmem:[%s330 + $0x10] sm:$0xff]
  %v334 = vld [vmem:[%s330 + $0x18] sm:$0xff]
  %v335 = vld [vmem:[%s330 + $0x20] sm:$0xff]
  %v336 = vld [vmem:[%s330 + $0x28] sm:$0xff]
  %v337 = vld [vmem:[%s330 + $0x30] sm:$0xff]
  %v338 = vld [vmem:[%s330 + $0x38] sm:$0xff]
  %v339 = vld [vmem:[%s330 + $0x40] sm:$0xff]
  %v340 = vld [vmem:[%s330 + $0x48] sm:$0xff]
  %v341 = vld [vmem:[%s330 + $0x50] sm:$0xff]
  %v342 = vld [vmem:[%s330 + $0x58] sm:$0xff]
  %v343 = vld [vmem:[%s330 + $0x60] sm:$0xff]
  %v344 = vld [vmem:[%s330 + $0x68] sm:$0xff]
  %v345 = vld [vmem:[%s330 + $0x70] sm:$0xff]
  %v346 = vld [vmem:[%s330 + $0x78] sm:$0xff]
  %v347 = vmul.f32 %v331, 1.442695
  %v348 = vpow.pop %v347
  %v349 = vmul.f32 %v332, 1.442695
  %v350 = vpow.pop %v349
  %v351 = vmul.f32 %v333, 1.442695
  %v352 = vpow.pop %v351
  %v353 = vmul.f32 %v334, 1.442695
  %v354 = vpow.pop %v353
  %v355 = vmul.f32 %v335, 1.442695
  %v356 = vpow.pop %v355
  %v357 = vmul.f32 %v336, 1.442695
  %v358 = vpow.pop %v357
  %v359 = vmul.f32 %v337, 1.442695
  %v360 = vpow.pop %v359
  %v361 = vmul.f32 %v338, 1.442695
  %v362 = vpow.pop %v361
  %v363 = vmul.f32 %v339, 1.442695
  %v364 = vpow.pop %v363
  %v365 = vmul.f32 %v340, 1.442695
  %v366 = vpow.pop %v365
  %v367 = vmul.f32 %v341, 1.442695
  %v368 = vpow.pop %v367
  %v369 = vmul.f32 %v342, 1.442695
  %v370 = vpow.pop %v369
  %v371 = vmul.f32 %v343, 1.442695
  %v372 = vpow.pop %v371
  %v373 = vmul.f32 %v344, 1.442695
  %v374 = vpow.pop %v373
  %v375 = vmul.f32 %v345, 1.442695
  %v376 = vpow.pop %v375
  %v377 = vmul.f32 %v346, 1.442695
  %v378 = vpow.pop %v377
  %v379 = vadd.f32 %v348, 1.0
  %v380 = vlog2.pop %v379
  %v381 = vmul.f32 %v380, 0.6931472
  %v382 = vmul.f32 -0.5, %v348
  %v383 = vadd.f32 %v382, 1.0
  %v384 = vmul.f32 %v383, %v348
  %v385 = vand.u32 2147483647, %v348
  %vm386 = vcmp.lt.f32.partialorder %v385, 0.0004427343
  %v387 = vsel %vm386, %v384, %v381
  %v388 = vadd.f32 %v350, 1.0
  %v389 = vlog2.pop %v388
  %v390 = vmul.f32 %v389, 0.6931472
  %v391 = vmul.f32 -0.5, %v350
  %v392 = vadd.f32 %v391, 1.0
  %v393 = vmul.f32 %v392, %v350
  %v394 = vand.u32 2147483647, %v350
  %vm395 = vcmp.lt.f32.partialorder %v394, 0.0004427343
  %v396 = vsel %vm395, %v393, %v390
  %v397 = vadd.f32 %v352, 1.0
  %v398 = vlog2.pop %v397
  %v399 = vmul.f32 %v398, 0.6931472
  %v400 = vmul.f32 -0.5, %v352
  %v401 = vadd.f32 %v400, 1.0
  %v402 = vmul.f32 %v401, %v352
  %v403 = vand.u32 2147483647, %v352
  %vm404 = vcmp.lt.f32.partialorder %v403, 0.0004427343
  %v405 = vsel %vm404, %v402, %v399
  %v406 = vadd.f32 %v354, 1.0
  %v407 = vlog2.pop %v406
  %v408 = vmul.f32 %v407, 0.6931472
  %v409 = vmul.f32 -0.5, %v354
  %v410 = vadd.f32 %v409, 1.0
  %v411 = vmul.f32 %v410, %v354
  %v412 = vand.u32 2147483647, %v354
  %vm413 = vcmp.lt.f32.partialorder %v412, 0.0004427343
  %v414 = vsel %vm413, %v411, %v408
  %v415 = vadd.f32 %v356, 1.0
  %v416 = vlog2.pop %v415
  %v417 = vmul.f32 %v416, 0.6931472
  %v418 = vmul.f32 -0.5, %v356
  %v419 = vadd.f32 %v418, 1.0
  %v420 = vmul.f32 %v419, %v356
  %v421 = vand.u32 2147483647, %v356
  %vm422 = vcmp.lt.f32.partialorder %v421, 0.0004427343
  %v423 = vsel %vm422, %v420, %v417
  %v424 = vadd.f32 %v358, 1.0
  %v425 = vlog2.pop %v424
  %v426 = vmul.f32 %v425, 0.6931472
  %v427 = vmul.f32 -0.5, %v358
  %v428 = vadd.f32 %v427, 1.0
  %v429 = vmul.f32 %v428, %v358
  %v430 = vand.u32 2147483647, %v358
  %vm431 = vcmp.lt.f32.partialorder %v430, 0.0004427343
  %v432 = vsel %vm431, %v429, %v426
  %v433 = vadd.f32 %v360, 1.0
  %v434 = vlog2.pop %v433
  %v435 = vmul.f32 %v434, 0.6931472
  %v436 = vmul.f32 -0.5, %v360
  %v437 = vadd.f32 %v436, 1.0
  %v438 = vmul.f32 %v437, %v360
  %v439 = vand.u32 2147483647, %v360
  %vm440 = vcmp.lt.f32.partialorder %v439, 0.0004427343
  %v441 = vsel %vm440, %v438, %v435
  %v442 = vadd.f32 %v362, 1.0
  %v443 = vlog2.pop %v442
  %v444 = vmul.f32 %v443, 0.6931472
  %v445 = vmul.f32 -0.5, %v362
  %v446 = vadd.f32 %v445, 1.0
  %v447 = vmul.f32 %v446, %v362
  %v448 = vand.u32 2147483647, %v362
  %vm449 = vcmp.lt.f32.partialorder %v448, 0.0004427343
  %v450 = vsel %vm449, %v447, %v444
  %v451 = vadd.f32 %v364, 1.0
  %v452 = vlog2.pop %v451
  %v453 = vmul.f32 %v452, 0.6931472
  %v454 = vmul.f32 -0.5, %v364
  %v455 = vadd.f32 %v454, 1.0
  %v456 = vmul.f32 %v455, %v364
  %v457 = vand.u32 2147483647, %v364
  %vm458 = vcmp.lt.f32.partialorder %v457, 0.0004427343
  %v459 = vsel %vm458, %v456, %v453
  %v460 = vadd.f32 %v366, 1.0
  %v461 = vlog2.pop %v460
  %v462 = vmul.f32 %v461, 0.6931472
  %v463 = vmul.f32 -0.5, %v366
  %v464 = vadd.f32 %v463, 1.0
  %v465 = vmul.f32 %v464, %v366
  %v466 = vand.u32 2147483647, %v366
  %vm467 = vcmp.lt.f32.partialorder %v466, 0.0004427343
  %v468 = vsel %vm467, %v465, %v462
  %v469 = vadd.f32 %v368, 1.0
  %v470 = vlog2.pop %v469
  %v471 = vmul.f32 %v470, 0.6931472
  %v472 = vmul.f32 -0.5, %v368
  %v473 = vadd.f32 %v472, 1.0
  %v474 = vmul.f32 %v473, %v368
  %v475 = vand.u32 2147483647, %v368
  %vm476 = vcmp.lt.f32.partialorder %v475, 0.0004427343
  %v477 = vsel %vm476, %v474, %v471
  %v478 = vadd.f32 %v370, 1.0
  %v479 = vlog2.pop %v478
  %v480 = vmul.f32 %v479, 0.6931472
  %v481 = vmul.f32 -0.5, %v370
  %v482 = vadd.f32 %v481, 1.0
  %v483 = vmul.f32 %v482, %v370
  %v484 = vand.u32 2147483647, %v370
  %vm485 = vcmp.lt.f32.partialorder %v484, 0.0004427343
  %v486 = vsel %vm485, %v483, %v480
  %v487 = vadd.f32 %v372, 1.0
  %v488 = vlog2.pop %v487
  %v489 = vmul.f32 %v488, 0.6931472
  %v490 = vmul.f32 -0.5, %v372
  %v491 = vadd.f32 %v490, 1.0
  %v492 = vmul.f32 %v491, %v372
  %v493 = vand.u32 2147483647, %v372
  %vm494 = vcmp.lt.f32.partialorder %v493, 0.0004427343
  %v495 = vsel %vm494, %v492, %v489
  %v496 = vadd.f32 %v374, 1.0
  %v497 = vlog2.pop %v496
  %v498 = vmul.f32 %v497, 0.6931472
  %v499 = vmul.f32 -0.5, %v374
  %v500 = vadd.f32 %v499, 1.0
  %v501 = vmul.f32 %v500, %v374
  %v502 = vand.u32 2147483647, %v374
  %vm503 = vcmp.lt.f32.partialorder %v502, 0.0004427343
  %v504 = vsel %vm503, %v501, %v498
  %v505 = vadd.f32 %v376, 1.0
  %v506 = vlog2.pop %v505
  %v507 = vmul.f32 %v506, 0.6931472
  %v508 = vmul.f32 -0.5, %v376
  %v509 = vadd.f32 %v508, 1.0
  %v510 = vmul.f32 %v509, %v376
  %v511 = vand.u32 2147483647, %v376
  %vm512 = vcmp.lt.f32.partialorder %v511, 0.0004427343
  %v513 = vsel %vm512, %v510, %v507
  %v514 = vadd.f32 %v378, 1.0
  %v515 = vlog2.pop %v514
  %v516 = vmul.f32 %v515, 0.6931472
  %v517 = vmul.f32 -0.5, %v378
  %v518 = vadd.f32 %v517, 1.0
  %v519 = vmul.f32 %v518, %v378
  %v520 = vand.u32 2147483647, %v378
  %vm521 = vcmp.lt.f32.partialorder %v520, 0.0004427343
  %v522 = vsel %vm521, %v519, %v516
  %s523 = scalar_lea.vmem %s2, 256
  %v524 = vld [vmem:[%s523] sm:$0xff]
  %v525 = vld [vmem:[%s523 + $0x8] sm:$0xff]
  %v526 = vld [vmem:[%s523 + $0x10] sm:$0xff]
  %v527 = vld [vmem:[%s523 + $0x18] sm:$0xff]
  %v528 = vld [vmem:[%s523 + $0x20] sm:$0xff]
  %v529 = vld [vmem:[%s523 + $0x28] sm:$0xff]
  %v530 = vld [vmem:[%s523 + $0x30] sm:$0xff]
  %v531 = vld [vmem:[%s523 + $0x38] sm:$0xff]
  %v532 = vld [vmem:[%s523 + $0x40] sm:$0xff]
  %v533 = vld [vmem:[%s523 + $0x48] sm:$0xff]
  %v534 = vld [vmem:[%s523 + $0x50] sm:$0xff]
  %v535 = vld [vmem:[%s523 + $0x58] sm:$0xff]
  %v536 = vld [vmem:[%s523 + $0x60] sm:$0xff]
  %v537 = vld [vmem:[%s523 + $0x68] sm:$0xff]
  %v538 = vld [vmem:[%s523 + $0x70] sm:$0xff]
  %v539 = vld [vmem:[%s523 + $0x78] sm:$0xff]
  %v540 = vmul.f32 %v387, %v524
  %v541 = vmul.f32 %v396, %v525
  %v542 = vmul.f32 %v405, %v526
  %v543 = vmul.f32 %v414, %v527
  %v544 = vmul.f32 %v423, %v528
  %v545 = vmul.f32 %v432, %v529
  %v546 = vmul.f32 %v441, %v530
  %v547 = vmul.f32 %v450, %v531
  %v548 = vmul.f32 %v459, %v532
  %v549 = vmul.f32 %v468, %v533
  %v550 = vmul.f32 %v477, %v534
  %v551 = vmul.f32 %v486, %v535
  %v552 = vmul.f32 %v495, %v536
  %v553 = vmul.f32 %v504, %v537
  %v554 = vmul.f32 %v513, %v538
  %v555 = vmul.f32 %v522, %v539
  %v556 = vadd.f32 %v314, %v540
  %v557 = vadd.f32 %v315, %v541
  %v558 = vadd.f32 %v316, %v542
  %v559 = vadd.f32 %v317, %v543
  %v560 = vadd.f32 %v318, %v544
  %v561 = vadd.f32 %v319, %v545
  %v562 = vadd.f32 %v320, %v546
  %v563 = vadd.f32 %v321, %v547
  %v564 = vadd.f32 %v322, %v548
  %v565 = vadd.f32 %v323, %v549
  %v566 = vadd.f32 %v324, %v550
  %v567 = vadd.f32 %v325, %v551
  %v568 = vadd.f32 %v326, %v552
  %v569 = vadd.f32 %v327, %v553
  %v570 = vadd.f32 %v328, %v554
  %v571 = vadd.f32 %v329, %v555
  %572 = vst [vmem:[%s6] sm:$0xff] %v556
  %573 = vst [vmem:[%s6 + $0x8] sm:$0xff] %v557
  %574 = vst [vmem:[%s6 + $0x10] sm:$0xff] %v558
  %575 = vst [vmem:[%s6 + $0x18] sm:$0xff] %v559
  %576 = vst [vmem:[%s6 + $0x20] sm:$0xff] %v560
  %577 = vst [vmem:[%s6 + $0x28] sm:$0xff] %v561
  %578 = vst [vmem:[%s6 + $0x30] sm:$0xff] %v562
  %579 = vst [vmem:[%s6 + $0x38] sm:$0xff] %v563
  %580 = vst [vmem:[%s6 + $0x40] sm:$0xff] %v564
  %581 = vst [vmem:[%s6 + $0x48] sm:$0xff] %v565
  %582 = vst [vmem:[%s6 + $0x50] sm:$0xff] %v566
  %583 = vst [vmem:[%s6 + $0x58] sm:$0xff] %v567
  %584 = vst [vmem:[%s6 + $0x60] sm:$0xff] %v568
  %585 = vst [vmem:[%s6 + $0x68] sm:$0xff] %v569
  %586 = vst [vmem:[%s6 + $0x70] sm:$0xff] %v570
  %587 = vst [vmem:[%s6 + $0x78] sm:$0xff] %v571
  %v588 = vld [vmem:[%s3] sm:$0x1]
  %s589 = scalar_lea.vmem %s3, 1
  %v590 = vld [vmem:[%s589] sm:$0x1]
  %v591 = vmul.f32 %v590, 1.442695
  %v592 = vpow.pop %v591
  %v593 = vadd.f32 %v592, 1.0
  %v594 = vlog2.pop %v593
  %v595 = vmul.f32 %v594, 0.6931472
  %v596 = vmul.f32 -0.5, %v592
  %v597 = vadd.f32 %v596, 1.0
  %v598 = vmul.f32 %v597, %v592
  %v599 = vand.u32 2147483647, %v592
  %vm600 = vcmp.lt.f32.partialorder %v599, 0.0004427343
  %v601 = vsel %vm600, %v598, %v595
  %s602 = scalar_lea.vmem %s3, 2
  %v603 = vld [vmem:[%s602] sm:$0x1]
  %v604 = vmul.f32 %v601, %v603
  %v605 = vadd.f32 %v588, %v604
  %606 = vst [vmem:[%s7] sm:$0x1] %v605
  // Predicated region
  $region18: #{mlp_bbb_forward.2} parent=0 // pred_check
    _
  $region19: #{mlp_bbb_forward.2} parent=0 // pred_check_branch
    %608 = sbr.rel (0) target = $region21
  $region20: #{mlp_bbb_forward.2} parent=0 // pred_region
    _
  $region21: #{mlp_bbb_forward.2} parent=0 // pred_fallthru
    _
  // Predicated region
  $region22: #{mlp_bbb_forward.2} parent=0 // pred_check
    _
  $region23: #{mlp_bbb_forward.2} parent=0 // pred_check_branch
    %610 = sbr.rel (0) target = $region25
  $region24: #{mlp_bbb_forward.2} parent=0 // pred_region
    _
  $region25: #{mlp_bbb_forward.2} parent=0 // pred_fallthru
    _
  // Predicated region
  $region26: #{mlp_bbb_forward.2} parent=0 // pred_check
    _
  $region27: #{mlp_bbb_forward.2} parent=0 // pred_check_branch
    %612 = sbr.rel (0) target = $region29
  $region28: #{mlp_bbb_forward.2} parent=0 // pred_region
    _
  $region29: #{mlp_bbb_forward.2} parent=0 // pred_fallthru
    _
  // Predicated region
  $region30: #{mlp_bbb_forward.2} parent=0 // pred_check
    _
  $region31: #{mlp_bbb_forward.2} parent=0 // pred_check_branch
    %614 = sbr.rel (0) target = $region33
  $region32: #{mlp_bbb_forward.2} parent=0 // pred_region
    _
  $region33: #{mlp_bbb_forward.2} parent=0 // pred_fallthru
    _
  // Predicated region
  $region34: #{mlp_bbb_forward.2} parent=0 // pred_check
    _
  $region35: #{mlp_bbb_forward.2} parent=0 // pred_check_branch
    %616 = sbr.rel (0) target = $region37
  $region36: #{mlp_bbb_forward.2} parent=0 // pred_region
    _
  $region37: #{mlp_bbb_forward.2} parent=0 // pred_fallthru
    _
  // Predicated region
  $region38: #{mlp_bbb_forward.2} parent=0 // pred_check
    _
  $region39: #{mlp_bbb_forward.2} parent=0 // pred_check_branch
    %618 = sbr.rel (0) target = $region41
  $region40: #{mlp_bbb_forward.2} parent=0 // pred_region
    _
  $region41: #{mlp_bbb_forward.2} parent=0 // pred_fallthru
    _
  // Predicated region
  $region42: #{mlp_bbb_forward.2} parent=0 // pred_check
    _
  $region43: #{mlp_bbb_forward.2} parent=0 // pred_check_branch
    %620 = sbr.rel (0) target = $region45
  $region44: #{mlp_bbb_forward.2} parent=0 // pred_region
    _
  $region45: #{mlp_bbb_forward.2} parent=0 // pred_fallthru
    _
  // Predicated region
  $region46: #{mlp_bbb_forward.2} parent=0 // pred_check
    _
  $region47: #{mlp_bbb_forward.2} parent=0 // pred_check_branch
    %622 = sbr.rel (0) target = $region49
  $region48: #{mlp_bbb_forward.2} parent=0 // pred_region
    _
  $region49: #{mlp_bbb_forward.2} parent=0 // pred_fallthru
    _

</llo_original>
